<compile_context>
chip_gen: v6e
topology: v6e:2x2x1
jax: 0.10.0
libtpu: 0.0.40
codegen_flags: <defaults>
</compile_context>

<pallas_src>
import functools

import jax
import jax.numpy as jnp
from jax.experimental import pallas as pl
from jax.experimental.pallas import tpu as pltpu


# ----------------------------------------------------------------------------
# One-time probe: resolve pltpu.roll's rotation convention so the conv "gather"
# shift (result[p] = x[p + s]) is correct regardless of sign convention.
# ----------------------------------------------------------------------------
def _probe_roll_kernel(x_ref, o_ref):
    o_ref[...] = pltpu.roll(x_ref[...], shift=1, axis=1)


@functools.lru_cache(maxsize=None)
def _roll_is_jnp_convention() -> bool:
    x = jnp.tile(jnp.arange(128, dtype=jnp.float32), (8, 1))
    y = pl.pallas_call(
        _probe_roll_kernel,
        out_shape=jax.ShapeDtypeStruct((8, 128), jnp.float32),
    )(x)
    # jnp.roll convention: result[0] == x[-1] == 127
    return bool(y[0, 0] == 127.0)


def _round_up(x: int, m: int) -> int:
    return ((x + m - 1) // m) * m


# ----------------------------------------------------------------------------
# The fused Pallas kernel: conv1..conv3 (+relu) -> fc1 (+relu) -> fc2, all in VMEM.
# Runs once per net (grid=(n_nets,)); all per-net refs arrive with the net axis squeezed.
# ----------------------------------------------------------------------------
def _ddqn_fused_kernel(a0_ref, wk1_ref, wk2_ref, wk3_ref, w1p_ref, w2_ref, misc_ref,
                       o_ref, *, batch: int, width: int, ksize: int, hidden: int,
                       roll_is_jnp: bool):
    lanes = a0_ref.shape[-1]
    taps = tuple(i * width + j for i in range(ksize) for j in range(ksize))
    wdt = wk1_ref.dtype                      # bf16 storage dtype of all packed weights
    ones_row = jnp.ones((1, lanes), dtype=wdt)

    def shift_gather(a, s):
        # result[:, p] = a[:, p + s]; for every VALID output position p, p + s < H*W <= lanes,
        # so wrap-around only lands in lanes no valid downstream position ever reads — hence no
        # ReLU masks are needed anywhere.
        if s == 0:
            return a
        amount = (lanes - s) if roll_is_jnp else s
        return pltpu.roll(a, shift=amount, axis=1)

    def conv_relu(a, wk_ref):
        # a: (Cin*B, lanes) f32.  One K-dense matmul per layer: 9 shifted slabs + a constant-1
        # row stacked on the contraction axis; wk_ref is (Cout*B, 9*Cin*B + 1) batch-block-
        # diagonal weights with the bias folded into the last column.
        stacked = jnp.concatenate(
            [shift_gather(a, s).astype(wdt) for s in taps] + [ones_row], axis=0)
        out = jnp.dot(wk_ref[...], stacked, preferred_element_type=jnp.float32)
        return jnp.maximum(out, 0.0)

    a = conv_relu(a0_ref[...], wk1_ref)      # (C1*B, lanes)
    a = conv_relu(a, wk2_ref)                # (C2*B, lanes)
    a = conv_relu(a, wk3_ref)                # (C3*B, lanes)

    fb = misc_ref[...]                       # (2, >=128) f32: row0 = fc1 bias, row1 = fc2 bias

    # fc1: contraction over (channel, spatial) == sum over channels of (B, lanes)@(lanes, H).
    # The PyTorch NCHW flatten order is baked into w1p at pack time, with zeros at every
    # padded / conv3-invalid spatial position (so no conv3 mask and no compaction is needed).
    c3 = a.shape[0] // batch
    acc = None
    for c in range(c3):
        t = jnp.dot(a[c * batch:(c + 1) * batch, :].astype(wdt), w1p_ref[c],
                    preferred_element_type=jnp.float32)
        acc = t if acc is None else acc + t
    h = jnp.maximum(acc + fb[0:1, :hidden], 0.0)

    # fc2: output columns zero-padded to a full 128-lane slab -> lane-dense store.
    n_pad = w2_ref.shape[-1]
    q = jnp.dot(h.astype(wdt), w2_ref[...], preferred_element_type=jnp.float32)
    o_ref[...] = (q + fb[1:2, :n_pad]).astype(o_ref.dtype)


def _fused_forward(a0, packed, *, batch: int, width: int, ksize: int):
    lanes = int(a0.shape[-1])
    n_nets = int(packed["wk1"].shape[0])
    hidden = int(packed["w1p"].shape[-1])
    n_pad = int(packed["w2p"].shape[-1])

    kernel = functools.partial(
        _ddqn_fused_kernel, batch=batch, width=width, ksize=ksize, hidden=hidden,
        roll_is_jnp=_roll_is_jnp_convention())

    def per_net_spec(arr):
        # Leading "net" axis selected by the grid index, squeezed away inside the kernel.
        return pl.BlockSpec((None,) + tuple(arr.shape[1:]),
                            lambda n, _nd=arr.ndim: (n,) + (0,) * (_nd - 1))

    args = (a0, packed["wk1"], packed["wk2"], packed["wk3"],
            packed["w1p"], packed["w2p"], packed["misc"])
    in_specs = [pl.BlockSpec(tuple(a0.shape), lambda n: (0, 0))]
    in_specs += [per_net_spec(packed[k])
                 for k in ("wk1", "wk2", "wk3", "w1p", "w2p", "misc")]

    flops = 0
    for name in ("wk1", "wk2", "wk3"):
        _, m, k = packed[name].shape
        flops += 2 * int(m) * int(k) * lanes
    _, c3, _, _ = packed["w1p"].shape
    flops += 2 * int(c3) * batch * lanes * hidden
    flops += 2 * batch * hidden * n_pad
    flops *= n_nets
    out_bytes = n_nets * batch * n_pad * 4
    bytes_accessed = sum(int(a.size) * a.dtype.itemsize for a in args) + out_bytes

    return pl.pallas_call(
        kernel,
        grid=(n_nets,),
        out_shape=jax.ShapeDtypeStruct((n_nets, batch, n_pad), jnp.float32),
        in_specs=in_specs,
        out_specs=pl.BlockSpec((None, batch, n_pad), lambda n: (n, 0, 0)),
        compiler_params=pltpu.CompilerParams(dimension_semantics=("parallel",)),
        cost_estimate=pl.CostEstimate(
            flops=flops, transcendentals=0, bytes_accessed=bytes_accessed),
    )(*args)


@functools.partial(jax.jit, static_argnames=("n_actions", "ksize"))
def _ddqn_apply(packed, x, *, n_actions: int, ksize: int):
    x = x.astype(jnp.float32)
    b, c, h, w = x.shape
    lanes = int(packed["w1p"].shape[2])
    # NCHW -> (B*C, H*W) is a free reshape (batch-major rows); pad lanes to a 128 multiple.
    a0 = jnp.pad(x.reshape(b * c, h * w), ((0, 0), (0, lanes - h * w)))
    q = _fused_forward(a0, packed, batch=b, width=w, ksize=ksize)   # (n_nets, B, n_pad)
    return q[:, :, :n_actions]


# ----------------------------------------------------------------------------
# One-time parameter packing into the fused-kernel layout (pure data movement).
# ----------------------------------------------------------------------------
def pack_params(params, batch: int, height: int, width: int):
    B = int(batch)
    f32, wdt = jnp.float32, jnp.bfloat16
    ksize = int(params["conv1_w"].shape[0])
    hw = height * width
    lanes = _round_up(hw, 128)
    eye = jnp.eye(B, dtype=f32)

    def conv_pack(w, bvec, first_layer: bool):
        kh, kw, cin, cout = w.shape
        wt = jnp.transpose(w.astype(f32).reshape(kh * kw, cin, cout), (0, 2, 1))  # (k, co, ci)
        if first_layer:
            # first-layer input rows are batch-major (b*Cin + ci), straight from x.reshape
            wk = jnp.einsum("koc,bd->kobdc", wt, eye).reshape(kh * kw, cout * B, B * cin)
        else:
            # later-layer input/output rows are channel-major (c*B + b)
            wk = jnp.einsum("koc,bd->kobcd", wt, eye).reshape(kh * kw, cout * B, cin * B)
        # tap-stacked 2-D layout: columns = [tap0 rows | tap1 rows | ... ] + bias column
        wk2d = jnp.transpose(wk, (1, 0, 2)).reshape(cout * B, kh * kw * wk.shape[2])
        bias_col = jnp.repeat(bvec.astype(f32).reshape(-1), B).reshape(cout * B, 1)
        return jnp.concatenate([wk2d, bias_col], axis=1).astype(wdt)

    h1, w1v = height - ksize + 1, width - ksize + 1
    h2, w2v = h1 - ksize + 1, w1v - ksize + 1
    h3, w3v = h2 - ksize + 1, w2v - ksize + 1

    c3 = int(params["conv3_w"].shape[-1])
    hidden = int(params["fc1_w"].shape[-1])
    # fc1 rows are in PyTorch NCHW-flatten order (c*h3*w3 + y*w3 + x); scatter them onto the
    # padded (height x width) spatial grid so flatten/transpose AND the conv3 validity mask
    # are folded into the weights (zeros at invalid/padded positions).
    src = params["fc1_w"].astype(f32).reshape(c3, h3, w3v, hidden)
    grid = jnp.zeros((c3, height, width, hidden), f32).at[:, :h3, :w3v, :].set(src)
    w1p = jnp.pad(grid.reshape(c3, hw, hidden),
                  ((0, 0), (0, lanes - hw), (0, 0))).astype(wdt)

    n_actions = int(params["fc2_w"].shape[-1])
    n_pad = _round_up(n_actions, 128)
    w2p = jnp.pad(params["fc2_w"].astype(f32),
                  ((0, 0), (0, n_pad - n_actions))).astype(wdt)

    mw = max(n_pad, _round_up(hidden, 128))
    fb1 = jnp.pad(params["fc1_b"].astype(f32).reshape(1, -1), ((0, 0), (0, mw - hidden)))
    fb2 = jnp.pad(params["fc2_b"].astype(f32).reshape(1, -1), ((0, 0), (0, mw - n_actions)))
    misc = jnp.concatenate([fb1, fb2], axis=0)   # (2, mw) f32

    return {
        "wk1": conv_pack(params["conv1_w"], params["conv1_b"], True),
        "wk2": conv_pack(params["conv2_w"], params["conv2_b"], False),
        "wk3": conv_pack(params["conv3_w"], params["conv3_b"], False),
        "w1p": w1p,
        "w2p": w2p,
        "misc": misc,
    }


# ----------------------------------------------------------------------------
# DDQN_Base: online net + deep-copied (frozen) target net, dispatch on `model`.
# ----------------------------------------------------------------------------
class DDQNBase:
    """Packed caches are keyed on (mode, batch, H, W); call clear_packed_cache() after any
    mutation of self.online / self.target (e.g. training update or a future sync())."""

    def __init__(self, online_params):
        self.online = online_params
        # deepcopy semantics: identical, independent parameter copies (frozen by convention)
        self.target = jax.tree_util.tree_map(lambda p: jnp.array(p, copy=True), online_params)
        self._n_actions = int(online_params["fc2_w"].shape[-1])
        self._ksize = int(online_params["conv1_w"].shape[0])
        self._packed_cache = {}
        _roll_is_jnp_convention()  # resolve roll convention once, outside any jit trace

    def clear_packed_cache(self):
        self._packed_cache = {}

    def _packed(self, mode: str, batch: int, height: int, width: int):
        key = (mode, batch, height, width)
        if key not in self._packed_cache:
            if mode == "both":
                nets = (self.online, self.target)
            else:
                nets = (self.online if mode == "online" else self.target,)
            per_net = [pack_params(p, batch, height, width) for p in nets]
            self._packed_cache[key] = jax.tree_util.tree_map(
                lambda *xs: jnp.stack(xs, axis=0), *per_net)
        return self._packed_cache[key]

    def forward(self, x, model: str):
        if model not in ("online", "target"):
            raise ValueError(
                f"Model Type <{model}> could not be converted to DoubleQ.ModelType")
        b, _, h, w = x.shape
        packed = self._packed(model, b, h, w)
        return _ddqn_apply(packed, x, n_actions=self._n_actions, ksize=self._ksize)[0]

    def forward_both(self, x):
        # DDQN target step: online(x) AND target(x) in ONE fused pallas_call
        # (grid=(2,), parallel -> both TensorCores on v7x).
        b, _, h, w = x.shape
        packed = self._packed("both", b, h, w)
        q = _ddqn_apply(packed, x, n_actions=self._n_actions, ksize=self._ksize)
        return q[0], q[1]

    def sync(self):
        # TODO(synk): sync() is declared virtual (NotImplementedError) in the PyTorch base
        # class; a concrete subclass would copy online -> target then clear_packed_cache().
        raise NotImplementedError("Virtual Function")


# ----------------------------------------------------------------------------
# Deterministic parameter initialization (shapes implied by the mini-CNN docstring)
# ----------------------------------------------------------------------------
def init_params(key, c_in=4, n_actions=6, h=16, w=16, hidden=32):
    def uniform(key, shape, fan_in):
        bound = 1.0 / jnp.sqrt(jnp.float32(fan_in))
        return jax.random.uniform(key, shape, jnp.float32, -bound, bound)

    ks = jax.random.split(key, 10)
    k = 3  # 3x3 valid convs, stride 1
    c1, c2, c3 = 8, 16, 16
    oh = h - 3 * (k - 1)
    ow = w - 3 * (k - 1)
    flat = c3 * oh * ow
    return {
        "conv1_w": uniform(ks[0], (k, k, c_in, c1), c_in * k * k),
        "conv1_b": uniform(ks[1], (1, c1), c_in * k * k),
        "conv2_w": uniform(ks[2], (k, k, c1, c2), c1 * k * k),
        "conv2_b": uniform(ks[3], (1, c2), c1 * k * k),
        "conv3_w": uniform(ks[4], (k, k, c2, c3), c2 * k * k),
        "conv3_b": uniform(ks[5], (1, c3), c2 * k * k),
        "fc1_w": uniform(ks[6], (flat, hidden), flat),
        "fc1_b": uniform(ks[7], (1, hidden), flat),
        "fc2_w": uniform(ks[8], (hidden, n_actions), hidden),
        "fc2_b": uniform(ks[9], (1, n_actions), hidden),
    }


# Pure-JAX (XLA) reference of the same network, PyTorch semantics (for validation only).
def reference_forward(params, x):
    prec = jax.lax.Precision.HIGHEST

    def conv_relu(y, w, b):
        y = jax.lax.conv_general_dilated(
            y, w, window_strides=(1, 1), padding="VALID",
            dimension_numbers=("NCHW", "HWIO", "NCHW"), precision=prec)
        return jax.nn.relu(y + b.reshape(1, -1, 1, 1))

    y = x.astype(jnp.float32)
    y = conv_relu(y, params["conv1_w"], params["conv1_b"])
    y = conv_relu(y, params["conv2_w"], params["conv2_b"])
    y = conv_relu(y, params["conv3_w"], params["conv3_b"])
    y = y.reshape(x.shape[0], -1)  # NCHW flatten, as in PyTorch
    y = jax.nn.relu(jnp.dot(y, params["fc1_w"], precision=prec) + params["fc1_b"])
    return jnp.dot(y, params["fc2_w"], precision=prec) + params["fc2_b"]


if __name__ == "__main__":
    key = jax.random.PRNGKey(0)
    pkey, xkey = jax.random.split(key)

    B, C, H, W = 2, 4, 16, 16
    n_actions = 6
    x = jax.random.normal(xkey, (B, C, H, W), jnp.float32)

    model = DDQNBase(init_params(pkey, c_in=C, n_actions=n_actions, h=H, w=W, hidden=32))

    q_online = jax.block_until_ready(model.forward(x, "online"))
    q_target = jax.block_until_ready(model.forward(x, "target"))
    qo_b, qt_b = model.forward_both(x)
    qo_b = jax.block_until_ready(qo_b)
    qt_b = jax.block_until_ready(qt_b)

    assert q_online.shape == (B, n_actions), q_online.shape
    assert q_target.shape == (B, n_actions), q_target.shape
    assert bool(jnp.all(jnp.isfinite(q_online)))
    # target is a deep copy of online at init -> identical outputs
    assert bool(jnp.allclose(q_online, q_target))
    # fused two-net launch matches the per-net launches
    assert bool(jnp.allclose(qo_b, q_online, rtol=1e-5, atol=1e-6))
    assert bool(jnp.allclose(qt_b, q_target, rtol=1e-5, atol=1e-6))

    # numerical sanity check against the pure-JAX reference (bf16 weight/activation storage)
    q_ref = reference_forward(model.online, x)
    assert bool(jnp.allclose(q_online, q_ref, rtol=5e-2, atol=2e-2)), (
        float(jnp.max(jnp.abs(q_online - q_ref))))

    print("KERNEL_OK")
</pallas_src>

<mosaic_0001>
module attributes {stable_mosaic.version = 11 : i64} {
  func.func @_probe_roll_kernel(%arg0: memref<8x128xf32, #tpu.memory_space<vmem>>, %arg1: memref<8x128xf32, #tpu.memory_space<vmem>>) attributes {dimension_semantics = [], scalar_prefetch = 0 : i64, scratch_operands = 0 : i64, tpu.core_type = #tpu.core_type<tc>} {
    %c0 = arith.constant 0 : index
    %c0_0 = arith.constant 0 : index
    %0 = vector.load %arg0[%c0, %c0_0] : memref<8x128xf32, #tpu.memory_space<vmem>>, vector<8x128xf32>
    %c1_i32 = arith.constant 1 : i32
    %1 = tpu.dynamic_rotate %0 by %c1_i32 dim 1 : vector<8x128xf32>, i32 -> vector<8x128xf32>
    %c0_1 = arith.constant 0 : index
    %c0_2 = arith.constant 0 : index
    %2 = vector.load %arg1[%c0_1, %c0_2] : memref<8x128xf32, #tpu.memory_space<vmem>>, vector<8x128xf32>
    tpu.vector_store %arg1[%c0_1, %c0_2], %1 {strides = array<i32>} : memref<8x128xf32, #tpu.memory_space<vmem>>, vector<8x128xf32>,
    return
  }
}

</mosaic_0001>

<llo_original>
// kernel: tpu_custom_call.1
$region0: #{tpu_custom_call.1}
  #allocation0 [shape = 'u32[]', space=smem, size = 0x4, offset = 0x4, fixed_abs, tag = 'smem constant byte address 0x4 - core index']
  #allocation1 [shape = 'u32[144,128]{1,0:T(1,128)}', space=vmem, size = 0x12000, scoped, tag = 'internal scratch']
  %s0 = inlined_call_operand.hbm [shape: f32[8,128], index: 0, kind: input, shape index: {}]
  %s1 = inlined_call_operand.hbm [shape: f32[8,128], index: 1, kind: output, shape index: {}]
  %s2 = sld [smem:[#allocation0]]
  $region18: #{tpu_custom_call.1} parent=0
    _
  %s4 = ssub.s32 1, %s2
  %s5 = scalar_select 0, %s4, %s2
  $region1: #{tpu_custom_call.1} parent=0
    #allocation2 [shape = 'u8[4096]{0}', space=vmem, size = 0x1000, scoped, tag = 'input window, operand 0, single buffered']
    #allocation3 [shape = 's32[1]{0}', space=sflag, size = 0x4, scoped, tag = 'scoped memory for tpu_custom_call.1']
    #allocation4 [shape = 's32[1]{0}', space=sflag, size = 0x4, scoped, tag = 'scoped memory for tpu_custom_call.1']
    #allocation5 [shape = 'u8[4096]{0}', space=vmem, size = 0x1000, scoped, tag = 'output window, operand 0, single buffered']
    %6 = vsyncpa [#allocation3], 0
    %7 = vsyncpa [#allocation4], 0
    // Predicated region
    $region2: #{tpu_custom_call.1} parent=1 // pred_check
      _
    $region3: #{tpu_custom_call.1} parent=1 // pred_check_branch
      %9 = sbr.rel (0) target = $region5
    $region4: #{tpu_custom_call.1} parent=1 // pred_region
      %s11 = ssub.s32 128, 128
      %12 = vsyncadd [#allocation3], %s11
      %s14 = sshll.u32 [#allocation2], 4
      %s15 = int_to_ptr.vmem [resolvable:$true] %s14
      %17 = dma.hbm_to_vmem [thread:$0]  %s0, 128, %s15, [#allocation3]
    $region5: #{tpu_custom_call.1} parent=1 // pred_fallthru
      _
    // Predicated region
    $region6: #{tpu_custom_call.1} parent=1 // pred_check
      _
    $region7: #{tpu_custom_call.1} parent=1 // pred_check_branch
      %19 = sbr.rel (0) target = $region9
    $region8: #{tpu_custom_call.1} parent=1 // pred_region
      %20 = dma.done [#allocation3], 128
    $region9: #{tpu_custom_call.1} parent=1 // pred_fallthru
      _
    %v21 = vld [vmem:[#allocation2] sm:$0xff]
    %22 = vrot.lane.b32.xlu0 %v21, 1
    %v23 = vpop.permute.xlu0 %22
    %24 = vst [vmem:[#allocation5] sm:$0xff] %v23
    // Predicated region
    $region10: #{tpu_custom_call.1} parent=1 // pred_check
      _
    $region11: #{tpu_custom_call.1} parent=1 // pred_check_branch
      %26 = sbr.rel (0) target = $region13
    $region12: #{tpu_custom_call.1} parent=1 // pred_region
      %s28 = ssub.s32 128, 128
      %29 = vsyncadd [#allocation4], %s28
      %s31 = sshll.u32 [#allocation5], 4
      %s32 = int_to_ptr.vmem [resolvable:$true] %s31
      %34 = dma.vmem_to_hbm [thread:$0]  %s32, 128, %s1, [#allocation4]
    $region13: #{tpu_custom_call.1} parent=1 // pred_fallthru
      _
    // Predicated region
    $region14: #{tpu_custom_call.1} parent=1 // pred_check
      _
    $region15: #{tpu_custom_call.1} parent=1 // pred_check_branch
      %36 = sbr.rel (0) target = $region17
    $region16: #{tpu_custom_call.1} parent=1 // pred_region
      %37 = dma.done [#allocation4], 128
    $region17: #{tpu_custom_call.1} parent=1 // pred_fallthru
      _
    %38 = vsyncpa [#allocation3], 1
    %39 = vsyncpa [#allocation4], 1

</llo_original>
